<compile_context>
chip_gen: v6e
topology: v6e:2x2x1
jax: 0.10.0
libtpu: 0.0.40
codegen_flags: <defaults>
</compile_context>

<pallas_src>
import functools
import math

import numpy as np
import jax
import jax.numpy as jnp
from jax import lax
from jax.experimental import pallas as pl
from jax.experimental.pallas import tpu as pltpu


# ------------------------------ generic helpers ------------------------------

def _gelu(x):
    # nn.GELU() default: exact erf-based GELU.
    return 0.5 * x * (1.0 + lax.erf(x * (1.0 / math.sqrt(2.0))))


@functools.lru_cache(maxsize=None)
def _vmem_limit_bytes():
    """Generation-aware VMEM budget: ~75% of physical capacity
    (~48 MiB on v7x, ~96 MiB on v5e/v6e), with a safety cap."""
    cap = None
    try:
        info = pltpu.get_tpu_info()
        cap = getattr(info, "vmem_capacity_bytes", None)
    except Exception:
        cap = None
    if not cap:
        cap = 64 * 1024 * 1024          # conservative fallback (v7x-sized)
    return int(min(cap * 3 // 4, 112 * 1024 * 1024))


def _compiler_params():
    return pltpu.CompilerParams(dimension_semantics=("parallel",),
                                vmem_limit_bytes=_vmem_limit_bytes())


# --------------------- 1x1 conv (+BN+GELU) as per-batch GEMM -----------------

def _flatten_gemm_kernel(x_ref, w_ref, sh_ref, o_ref):
    y = jnp.dot(w_ref[...], x_ref[0], preferred_element_type=jnp.float32)
    y = _gelu(y + sh_ref[...])
    o_ref[0] = y.astype(o_ref.dtype)


def flatten_conv_bn_gelu(x, w, shift, out_dtype):
    """1x1 conv + folded-BN shift + exact GELU, channel-major.
    x: [B, K, H, W]; w: [oc, K] (BN scale folded in); shift: [oc]."""
    B, K, H, W = x.shape
    S = H * W
    oc = w.shape[0]
    x3 = x.reshape(B, K, S)
    sh = shift.reshape(oc, 1).astype(jnp.float32)
    cost = pl.CostEstimate(
        flops=2 * B * oc * K * S,
        transcendentals=B * oc * S,
        bytes_accessed=int(x3.size * x3.dtype.itemsize
                           + w.size * w.dtype.itemsize
                           + B * oc * S * jnp.dtype(out_dtype).itemsize))
    out = pl.pallas_call(
        _flatten_gemm_kernel,
        out_shape=jax.ShapeDtypeStruct((B, oc, S), out_dtype),
        grid=(B,),
        in_specs=[pl.BlockSpec((1, K, S), lambda b: (b, 0, 0)),
                  pl.BlockSpec((oc, K), lambda b: (0, 0)),
                  pl.BlockSpec((oc, 1), lambda b: (0, 0))],
        out_specs=pl.BlockSpec((1, oc, S), lambda b: (b, 0, 0)),
        compiler_params=_compiler_params(),
        cost_estimate=cost,
    )(x3, w, sh)
    return out.reshape(B, oc, H, W)


# ------------- 3x3 conv (pad 1, stride 1/2) + BN + GELU [+residual] ----------

def _make_conv3x3_kernel(taps, cin, n_cols, has_res):
    def kernel(*refs):
        if has_res:
            x_ref, w_ref, sh_ref, r_ref, o_ref, col_ref = refs
        else:
            x_ref, w_ref, sh_ref, o_ref, col_ref = refs
        # In-VMEM im2col: 9 contiguous lane-slices -> one [9*Cin, n_cols] tile.
        for t, (coff, soff) in enumerate(taps):                  # static 9-tap loop
            col_ref[t * cin:(t + 1) * cin, :] = \
                x_ref[0, coff:coff + cin, soff:soff + n_cols]
        # Single fused-K MXU dot (K = 9*Cin), f32 accumulate.
        y = jnp.dot(w_ref[...], col_ref[...], preferred_element_type=jnp.float32)
        y = _gelu(y + sh_ref[...])
        if has_res:
            y = y + r_ref[0].astype(jnp.float32)
        o_ref[0] = y.astype(o_ref.dtype)
    return kernel


def conv3x3_bn_gelu(x, w_hwio, shift, *, stride, residual=None, out_dtype=None,
                    padded_hw=None):
    """3x3 conv (padding 1, stride 1/2) + folded-BN shift + GELU [+ residual].

    Channel-major.  x is either
      * [B, Cin, H, W]      (padded_hw=None; this wrapper pads), or
      * [B, Cin, H+3, W+2]  (padded_hw=(H, W); already zero-padded in the
                             layout bilinear_up2_padded emits; stride must be 1).
    w_hwio: [3, 3, Cin, Cout] with the BN scale already folded in.
    """
    out_dtype = out_dtype or x.dtype
    B = x.shape[0]
    Cin, Cout = w_hwio.shape[-2], w_hwio.shape[-1]

    if padded_hw is not None:
        assert stride == 1
        H, W = padded_hw
        assert x.shape == (B, Cin, H + 3, W + 2), (x.shape, (B, Cin, H + 3, W + 2))
        Ws, Ho, Wo = W + 2, H, W
        xflat = x.reshape(B, Cin, (H + 3) * Ws)
        taps = [(0, kh * Ws + kw) for kh in range(3) for kw in range(3)]
        cin_total = Cin
    else:
        _, cx, H, W = x.shape
        assert cx == Cin
        if stride == 1:
            xp = jnp.pad(x, ((0, 0), (0, 0), (1, 2), (1, 1)))   # single pad (incl. slack row)
            Ws, Ho, Wo = W + 2, H, W
            xflat = xp.reshape(B, Cin, (H + 3) * Ws)
            taps = [(0, kh * Ws + kw) for kh in range(3) for kw in range(3)]
            cin_total = Cin
        else:
            assert stride == 2 and H % 2 == 0 and W % 2 == 0
            # Single pad; the 2x2 phase split (one fused XLA copy) makes every
            # stride-2 tap a contiguous lane-slice of one phase's flat extent.
            xp = jnp.pad(x, ((0, 0), (0, 0), (1, 3), (1, 1)))
            phases = jnp.concatenate(
                [xp[:, :, i::2, j::2] for i in (0, 1) for j in (0, 1)], axis=1)
            Hs, Ws = H // 2 + 2, W // 2 + 1
            Ho, Wo = H // 2, W // 2
            xflat = phases.reshape(B, 4 * Cin, Hs * Ws)
            taps = [(((kh % 2) * 2 + (kw % 2)) * Cin,
                     (kh // 2) * Ws + (kw // 2))
                    for kh in range(3) for kw in range(3)]
            cin_total = 4 * Cin

    n_cols = Ho * Ws
    R_in = xflat.shape[2]
    # Static invariant: the last tap's slice must stay inside the buffer.
    assert max(s for _, s in taps) + n_cols <= R_in, (taps, n_cols, R_in)

    w2 = w_hwio.reshape(9 * Cin, Cout).T                 # [Cout, 9*Cin], tap-major
    sh = shift.reshape(Cout, 1).astype(jnp.float32)

    args = [xflat, w2, sh]
    in_specs = [pl.BlockSpec((1, cin_total, R_in), lambda b: (b, 0, 0)),
                pl.BlockSpec((Cout, 9 * Cin), lambda b: (0, 0)),
                pl.BlockSpec((Cout, 1), lambda b: (0, 0))]
    has_res = residual is not None
    rp = None
    if has_res:
        assert residual.shape == (B, Cout, Ho, Wo)
        rp = jnp.pad(residual, ((0, 0), (0, 0), (0, 0), (0, Ws - Wo)))
        rp = rp.reshape(B, Cout, n_cols)
        args.append(rp)
        in_specs.append(pl.BlockSpec((1, Cout, n_cols), lambda b: (b, 0, 0)))

    cost = pl.CostEstimate(
        flops=2 * B * Cout * 9 * Cin * n_cols,
        transcendentals=B * Cout * n_cols,
        bytes_accessed=int(xflat.size * xflat.dtype.itemsize
                           + w2.size * w2.dtype.itemsize
                           + B * Cout * n_cols * jnp.dtype(out_dtype).itemsize
                           + (rp.size * rp.dtype.itemsize if has_res else 0)))

    out = pl.pallas_call(
        _make_conv3x3_kernel(tuple(taps), Cin, n_cols, has_res),
        out_shape=jax.ShapeDtypeStruct((B, Cout, n_cols), out_dtype),
        grid=(B,),
        in_specs=in_specs,
        out_specs=pl.BlockSpec((1, Cout, n_cols), lambda b: (b, 0, 0)),
        scratch_shapes=[pltpu.VMEM((9 * Cin, n_cols), xflat.dtype)],
        compiler_params=_compiler_params(),
        cost_estimate=cost,
    )(*args)
    # TODO(synk): row-tile + store only the Wo valid columns so this crop (a
    #             strided HBM copy) and the junk-column epilogue work go away.
    return out.reshape(B, Cout, Ho, Ws)[:, :, :, :Wo]


# ---------------- bilinear x2 upsample (align_corners), fused ----------------

def _upsample_matrix(n_in, n_out):
    """Bilinear interpolation matrix, align_corners=True (PyTorch semantics)."""
    m = np.zeros((n_out, n_in), dtype=np.float32)
    for i in range(n_out):
        src = i * (n_in - 1) / (n_out - 1) if n_out > 1 else 0.0
        i0 = int(np.floor(src))
        i1 = min(i0 + 1, n_in - 1)
        frac = src - i0
        m[i, i0] += 1.0 - frac
        m[i, i1] += frac
    return m


def _make_upsample_kernel(C, h, w):
    H2, W2 = 2 * h, 2 * w

    def kernel(mh_ref, mwt_ref, x_ref, o_ref):
        # Zero-fill once: the border becomes the following conv's padding.
        o_ref[...] = jnp.zeros(o_ref.shape, o_ref.dtype)
        mh = mh_ref[...]                       # [2h, h]  f32
        mwt = mwt_ref[...]                     # [w, 2w]  f32
        for c in range(C):                     # static per-channel loop
            xc = x_ref[0, c].astype(jnp.float32)                      # [h, w]
            y = jnp.dot(mh, xc, preferred_element_type=jnp.float32)   # [2h, w]
            z = jnp.dot(y, mwt, preferred_element_type=jnp.float32)   # [2h, 2w]
            o_ref[0, c, 1:1 + H2, 1:1 + W2] = z.astype(o_ref.dtype)
    return kernel


def bilinear_up2_padded(x, out_dtype):
    """x2 bilinear upsample (align_corners=True), channel-major, emitted
    directly in the zero-padded [B, C, 2h+3, 2w+2] layout that the following
    stride-1 conv3x3_bn_gelu(padded_hw=(2h, 2w)) consumes: one pallas_call per
    batch, no wrapper transposes, the upsampled tensor hits HBM exactly once.
    Mixing matrices stay f32 (interpolation weights are not bf16-exact)."""
    B, C, h, w = x.shape
    H2, W2 = 2 * h, 2 * w
    Hp, Wp = H2 + 3, W2 + 2
    mh = jnp.asarray(_upsample_matrix(h, H2), jnp.float32)        # [2h, h]
    mwt = jnp.asarray(_upsample_matrix(w, W2).T, jnp.float32)     # [w, 2w]
    cost = pl.CostEstimate(
        flops=2 * B * C * (H2 * h * w + H2 * w * W2),
        transcendentals=0,
        bytes_accessed=int(x.size * x.dtype.itemsize
                           + B * C * Hp * Wp * jnp.dtype(out_dtype).itemsize))
    return pl.pallas_call(
        _make_upsample_kernel(C, h, w),
        out_shape=jax.ShapeDtypeStruct((B, C, Hp, Wp), out_dtype),
        grid=(B,),
        in_specs=[pl.BlockSpec((H2, h), lambda b: (0, 0)),
                  pl.BlockSpec((w, W2), lambda b: (0, 0)),
                  pl.BlockSpec((1, C, h, w), lambda b: (b, 0, 0, 0))],
        out_specs=pl.BlockSpec((1, C, Hp, Wp), lambda b: (b, 0, 0, 0)),
        compiler_params=_compiler_params(),
        cost_estimate=cost,
    )(mh, mwt, x)


# ------------------------------ params / folding -----------------------------

def _fold_bn(bn, bias, eps=1e-5):
    """Inference BN + conv-bias folding -> (per-Cout scale, per-Cout shift)."""
    inv = bn["gamma"] / jnp.sqrt(bn["var"] + eps)
    shift = (bias - bn["mean"]) * inv + bn["beta"]
    return inv, shift


def init_params(key, in_channels, height, out_channels):
    cin = in_channels * height
    oc = out_channels
    keys = iter(jax.random.split(key, 16))

    def w(shape):
        return 0.05 * jax.random.normal(next(keys), shape, jnp.float32)

    def bn(n):
        k1, k2, k3, k4 = jax.random.split(next(keys), 4)
        return dict(
            gamma=1.0 + 0.1 * jax.random.normal(k1, (n,), jnp.float32),
            beta=0.1 * jax.random.normal(k2, (n,), jnp.float32),
            mean=0.1 * jax.random.normal(k3, (n,), jnp.float32),
            var=1.0 + 0.1 * jnp.abs(jax.random.normal(k4, (n,), jnp.float32)),
        )

    return dict(
        conv1_w=w((oc, cin)), conv1_b=w((oc,)), bn_flat1=bn(oc),          # 1x1
        enc1_w=w((3, 3, oc, oc * 2)), enc1_b=w((oc * 2,)), bn1=bn(oc * 2),
        enc2_w=w((3, 3, oc * 2, oc * 4)), enc2_b=w((oc * 4,)), bn2=bn(oc * 4),
        dec1_w=w((3, 3, oc * 4, oc * 2)), dec1_b=w((oc * 2,)), bn3=bn(oc * 2),
        dec2_w=w((3, 3, oc * 2, oc)), dec2_b=w((oc,)), bn4=bn(oc),
    )


# -------------------------------- forward pass --------------------------------

def bev2dfcn_forward(x, params, flatten_height=True, compute_dtype=jnp.bfloat16):
    """x: [B, in_channels*height, H, W] (NCHW) -> [B, out_channels, H, W] f32."""
    cd = compute_dtype
    xa = x.astype(cd)
    B, _, H, W = xa.shape

    if flatten_height:
        inv, s1 = _fold_bn(params["bn_flat1"], params["conv1_b"])
        w1 = params["conv1_w"] * inv[:, None]
        xa = flatten_conv_bn_gelu(xa, w1.astype(cd), s1, out_dtype=cd)

    inv, s = _fold_bn(params["bn1"], params["enc1_b"])
    e1 = conv3x3_bn_gelu(xa, (params["enc1_w"] * inv).astype(cd), s,
                         stride=2, out_dtype=cd)
    inv, s = _fold_bn(params["bn2"], params["enc2_b"])
    e2 = conv3x3_bn_gelu(e1, (params["enc2_w"] * inv).astype(cd), s,
                         stride=2, out_dtype=cd)

    inv, s = _fold_bn(params["bn3"], params["dec1_b"])
    u1 = bilinear_up2_padded(e2, out_dtype=cd)
    d1 = conv3x3_bn_gelu(u1, (params["dec1_w"] * inv).astype(cd), s,
                         stride=1, residual=e1, out_dtype=cd,
                         padded_hw=(H // 2, W // 2))

    inv, s = _fold_bn(params["bn4"], params["dec2_b"])
    u2 = bilinear_up2_padded(d1, out_dtype=cd)
    out = conv3x3_bn_gelu(u2, (params["dec2_w"] * inv).astype(cd), s,
                          stride=1, residual=xa, out_dtype=cd,
                          padded_hw=(H, W))
    return out.astype(jnp.float32)


# ----------------------- pure-JAX reference (correctness) ---------------------

def reference_forward(x, params, flatten_height=True):
    x = x.astype(jnp.float32)

    def conv3(z, w_hwio, shift, stride):
        y = lax.conv_general_dilated(
            z, w_hwio, (stride, stride), ((1, 1), (1, 1)),
            dimension_numbers=("NCHW", "HWIO", "NCHW"))
        return _gelu(y + shift[None, :, None, None])

    def up2(z):
        _, _, h, w_ = z.shape
        mh = jnp.asarray(_upsample_matrix(h, 2 * h))
        mw = jnp.asarray(_upsample_matrix(w_, 2 * w_))
        y = jnp.einsum("Hh,bchw->bcHw", mh, z)
        return jnp.einsum("Ww,bchw->bchW", mw, y)

    if flatten_height:
        inv, s1 = _fold_bn(params["bn_flat1"], params["conv1_b"])
        w1 = params["conv1_w"] * inv[:, None]
        x = _gelu(jnp.einsum("ok,bkhw->bohw", w1, x) + s1[None, :, None, None])

    inv, s = _fold_bn(params["bn1"], params["enc1_b"])
    e1 = conv3(x, params["enc1_w"] * inv, s, 2)
    inv, s = _fold_bn(params["bn2"], params["enc2_b"])
    e2 = conv3(e1, params["enc2_w"] * inv, s, 2)
    inv, s = _fold_bn(params["bn3"], params["dec1_b"])
    d1 = conv3(up2(e2), params["dec1_w"] * inv, s, 1) + e1
    inv, s = _fold_bn(params["bn4"], params["dec2_b"])
    return conv3(up2(d1), params["dec2_w"] * inv, s, 1) + x


# ------------------------------------ main ------------------------------------

if __name__ == "__main__":
    B, in_channels, height, out_channels, H, W = 2, 4, 4, 8, 16, 16
    key = jax.random.PRNGKey(0)
    kx, kp = jax.random.split(key)

    x = jax.random.normal(kx, (B, in_channels * height, H, W), jnp.float32)
    params = init_params(kp, in_channels, height, out_channels)

    # Correctness: f32 kernels vs. pure-JAX/XLA reference.
    out_f32 = jax.block_until_ready(
        bev2dfcn_forward(x, params, compute_dtype=jnp.float32))
    ref = jax.block_until_ready(reference_forward(x, params))
    assert out_f32.shape == ref.shape, (out_f32.shape, ref.shape)
    max_err = float(jnp.max(jnp.abs(out_f32 - ref)))
    assert max_err < 3e-2, f"mismatch vs reference, max abs err = {max_err}"

    # Performance configuration: bf16 MXU operands, f32 accumulate/epilogue.
    out = jax.block_until_ready(
        bev2dfcn_forward(x, params, compute_dtype=jnp.bfloat16))
    assert out.shape == (B, out_channels, H, W), out.shape
    assert bool(jnp.all(jnp.isfinite(out)))
    print("KERNEL_OK")
</pallas_src>

<mosaic_0001>
module attributes {stable_mosaic.version = 11 : i64} {
  func.func @_flatten_gemm_kernel(%arg0: i32, %arg1: memref<1x16x256xf32, #tpu.memory_space<vmem>>, %arg2: memref<8x16xf32, #tpu.memory_space<vmem>>, %arg3: memref<8x1xf32, #tpu.memory_space<vmem>>, %arg4: memref<1x8x256xf32, #tpu.memory_space<vmem>>) attributes {dimension_semantics = [#tpu.dimension_semantics<parallel>], iteration_bounds = array<i64: 2>, scalar_prefetch = 0 : i64, scratch_operands = 0 : i64, tpu.core_type = #tpu.core_type<tc>, window_params = [{transform_indices = @transform_0, window_bounds = array<i64: 1, 16, 256>}, {pipeline_mode = #tpu.pipeline_mode<synchronous>, transform_indices = @transform_1, window_bounds = array<i64: 8, 16>}, {pipeline_mode = #tpu.pipeline_mode<synchronous>, transform_indices = @transform_2, window_bounds = array<i64: 8, 1>}, {transform_indices = @transform_3, window_bounds = array<i64: 1, 8, 256>}]} {
    %c0 = arith.constant 0 : index
    %c0_0 = arith.constant 0 : index
    %0 = vector.load %arg2[%c0, %c0_0] : memref<8x16xf32, #tpu.memory_space<vmem>>, vector<8x16xf32>
    %c0_1 = arith.constant 0 : index
    %c0_2 = arith.constant 0 : index
    %c0_3 = arith.constant 0 : index
    %1 = vector.load %arg1[%c0_1, %c0_2, %c0_3] : memref<1x16x256xf32, #tpu.memory_space<vmem>>, vector<1x16x256xf32>
    %2 = vector.shape_cast %1 : vector<1x16x256xf32> to vector<16x256xf32>
    %cst = arith.constant dense<0.000000e+00> : vector<8x256xf32>
    %3 = tpu.matmul %0, %2, %cst {dimension_numbers = #tpu.dot_dimension_numbers<[1], [0], [0], [1], [0, 0, 1, 1], [], []>} : vector<8x16xf32>, vector<16x256xf32>, vector<8x256xf32> -> vector<8x256xf32>
    %c0_4 = arith.constant 0 : index
    %c0_5 = arith.constant 0 : index
    %4 = vector.load %arg3[%c0_4, %c0_5] : memref<8x1xf32, #tpu.memory_space<vmem>>, vector<8x1xf32>
    %5 = vector.broadcast %4 : vector<8x1xf32> to vector<8x256xf32>
    %6 = arith.addf %3, %5 : vector<8x256xf32>
    %cst_6 = arith.constant 5.000000e-01 : f32
    %7 = vector.broadcast %cst_6 : f32 to vector<8x256xf32>
    %8 = arith.mulf %7, %6 : vector<8x256xf32>
    %cst_7 = arith.constant 0.707106769 : f32
    %9 = vector.broadcast %cst_7 : f32 to vector<8x256xf32>
    %10 = arith.mulf %6, %9 : vector<8x256xf32>
    %11 = math.erf %10 : vector<8x256xf32>
    %cst_8 = arith.constant 1.000000e+00 : f32
    %12 = vector.broadcast %cst_8 : f32 to vector<8x256xf32>
    %13 = arith.addf %12, %11 : vector<8x256xf32>
    %14 = arith.mulf %8, %13 : vector<8x256xf32>
    %c0_9 = arith.constant 0 : index
    %c0_10 = arith.constant 0 : index
    %c0_11 = arith.constant 0 : index
    %15 = vector.load %arg4[%c0_9, %c0_10, %c0_11] : memref<1x8x256xf32, #tpu.memory_space<vmem>>, vector<1x8x256xf32>
    %16 = vector.shape_cast %15 : vector<1x8x256xf32> to vector<8x256xf32>
    %17 = vector.shape_cast %14 : vector<8x256xf32> to vector<1x8x256xf32>
    tpu.vector_store %arg4[%c0_9, %c0_10, %c0_11], %17 {strides = array<i32>} : memref<1x8x256xf32, #tpu.memory_space<vmem>>, vector<1x8x256xf32>,
    return
  }
  func.func @transform_0(%arg0: i32) -> (i32, i32, i32) {
    %c0_i32 = arith.constant 0 : i32
    %c0_i32_0 = arith.constant 0 : i32
    %c0_i32_1 = arith.constant 0 : i32
    return %arg0, %c0_i32, %c0_i32_0 : i32, i32, i32
  }
  func.func @transform_1(%arg0: i32) -> (i32, i32) {
    %c0_i32 = arith.constant 0 : i32
    %c0_i32_0 = arith.constant 0 : i32
    %c0_i32_1 = arith.constant 0 : i32
    return %c0_i32, %c0_i32_0 : i32, i32
  }
  func.func @transform_2(%arg0: i32) -> (i32, i32) {
    %c0_i32 = arith.constant 0 : i32
    %c0_i32_0 = arith.constant 0 : i32
    %c0_i32_1 = arith.constant 0 : i32
    return %c0_i32, %c0_i32_0 : i32, i32
  }
  func.func @transform_3(%arg0: i32) -> (i32, i32, i32) {
    %c0_i32 = arith.constant 0 : i32
    %c0_i32_0 = arith.constant 0 : i32
    %c0_i32_1 = arith.constant 0 : i32
    return %arg0, %c0_i32, %c0_i32_0 : i32, i32, i32
  }
}

</mosaic_0001>

<llo_original>
// kernel: tpu_custom_call.1
$region0: #{tpu_custom_call.1}
  #allocation0 [shape = 'u32[]', space=smem, size = 0x4, offset = 0x4, fixed_abs, tag = 'smem constant byte address 0x4 - core index']
  #allocation1 [shape = 'u32[144,128]{1,0:T(1,128)}', space=vmem, size = 0x12000, scoped, tag = 'internal scratch']
  %s0 = inlined_call_operand.hbm [shape: f32[2,16,256], index: 0, kind: input, shape index: {}]
  %s1 = inlined_call_operand.vmem [shape: f32[8,16], index: 1, kind: input, shape index: {}]
  %s2 = inlined_call_operand.vmem [shape: f32[8,1], index: 2, kind: input, shape index: {}]
  %s3 = inlined_call_operand.hbm [shape: f32[2,8,256], index: 3, kind: output, shape index: {}]
  %s4 = sld [smem:[#allocation0]]
  $region49: #{tpu_custom_call.1} parent=0
    _
  %s6 = ssub.s32 1, %s4
  %s7 = scalar_select 0, %s6, %s4
  $region1: #{tpu_custom_call.1} parent=0
    #allocation2 [shape = 'u8[32768]{0}', space=vmem, size = 0x8000, scoped, tag = 'input window, operand 0']
    #allocation3 [shape = 's32[2]{0}', space=sflag, size = 0x8, scoped, tag = 'scoped memory for tpu_custom_call.1']
    #allocation4 [shape = 's32[2]{0}', space=sflag, size = 0x8, scoped, tag = 'scoped memory for tpu_custom_call.1']
    #allocation5 [shape = 'u8[16384]{0}', space=vmem, size = 0x4000, scoped, tag = 'output window, operand 0']
    %8 = vsyncpa [#allocation3], 0
    %s9 = scalar_lea.sflag [#allocation3], 1
    %10 = vsyncpa %s9, 0
    %11 = vsyncpa [#allocation4], 0
    %s12 = scalar_lea.sflag [#allocation4], 1
    %13 = vsyncpa %s12, 0
    loop: start=0, step=1, limit=4
    $region2: #{tpu_custom_call.1} parent=1 // loop_pre_header
      _
    $region3: #{tpu_custom_call.1} parent=1 // loop_header
      %s15 = sphi 0, %s19
      %p16 = scmp.ge.s32.totalorder %s15, 4
      %s25 = sphi 0, %s27
      %s28 = sphi 0, %s25
      %s29 = sphi 0, %s28
      %s45 = sphi 0, %s29
      %s49 = sphi 0, %s49
      %s51 = sphi 0, %s49
      %s52 = sphi 0, %s51
      %s66 = sphi 0, %s52
      %s70 = sphi 0, %s70
      %s72 = sphi 0, %s70
      %s73 = sphi 0, %s72
      %s87 = sphi 0, %s73
      %s93 = sphi 0, %s95
      %s96 = sphi 0, %s93
      %s97 = sphi 0, %s96
      %s113 = sphi 0, %s97
    $region4: #{tpu_custom_call.1} parent=1 // loop_header_branch
      %18 = sbr.rel (%p16) target = $region8
    $region5: #{tpu_custom_call.1} parent=1 // loop_body
      %s20 = ssub.s32 %s15, 1
      %s21 = ssub.s32 %s15, 2
      %s22 = sadd.s32 %s15, 1
      %s23 = ssub.s32 %s15, %s22
      %p24 = scmp.eq.s32.totalorder %s23, 0
      %s26 = sadd.s32 %s25, 1
      %s27 = scalar_select %p24, %s25, %s26
      %p30 = pneg %p24
      %p31 = scmp.eq.s32.totalorder %s15, 1
      %p32 = por %p30, %p31
      %p33 = scmp.ne.s32.totalorder %s25, %s28
      %p34 = scmp.eq.s32.totalorder %s15, 0
      %p35 = por %p33, %p34
      %p36 = scmp.ne.s32.totalorder %s25, %s28
      %p37 = scmp.eq.s32.totalorder %s20, 1
      %p38 = por %p36, %p37
      %p39 = scmp.ne.s32.totalorder %s28, %s29
      %p40 = scmp.eq.s32.totalorder %s20, 0
      %p41 = por %p39, %p40
      %p42 = scmp.ne.s32.totalorder %s28, %s29
      %p43 = scmp.eq.s32.totalorder %s21, 1
      %p44 = por %p42, %p43
      %p46 = scmp.ne.s32.totalorder %s29, %s45
      %p47 = scmp.eq.s32.totalorder %s21, 0
      %p48 = por %p46, %p47
      %s50 = sadd.s32 %s49, 1
      %p53 = scmp.eq.s32.totalorder %s15, 1
      %p54 = scmp.ne.s32.totalorder %s49, %s51
      %p55 = scmp.eq.s32.totalorder %s15, 0
      %p56 = por %p54, %p55
      %p57 = scmp.ne.s32.totalorder %s49, %s51
      %p58 = scmp.eq.s32.totalorder %s20, 1
      %p59 = por %p57, %p58
      %p60 = scmp.ne.s32.totalorder %s51, %s52
      %p61 = scmp.eq.s32.totalorder %s20, 0
      %p62 = por %p60, %p61
      %p63 = scmp.ne.s32.totalorder %s51, %s52
      %p64 = scmp.eq.s32.totalorder %s21, 1
      %p65 = por %p63, %p64
      %p67 = scmp.ne.s32.totalorder %s52, %s66
      %p68 = scmp.eq.s32.totalorder %s21, 0
      %p69 = por %p67, %p68
      %s71 = sadd.s32 %s70, 1
      %p74 = scmp.eq.s32.totalorder %s15, 1
      %p75 = scmp.ne.s32.totalorder %s70, %s72
      %p76 = scmp.eq.s32.totalorder %s15, 0
      %p77 = por %p75, %p76
      %p78 = scmp.ne.s32.totalorder %s70, %s72
      %p79 = scmp.eq.s32.totalorder %s20, 1
      %p80 = por %p78, %p79
      %p81 = scmp.ne.s32.totalorder %s72, %s73
      %p82 = scmp.eq.s32.totalorder %s20, 0
      %p83 = por %p81, %p82
      %p84 = scmp.ne.s32.totalorder %s72, %s73
      %p85 = scmp.eq.s32.totalorder %s21, 1
      %p86 = por %p84, %p85
      %p88 = scmp.ne.s32.totalorder %s73, %s87
      %p89 = scmp.eq.s32.totalorder %s21, 0
      %p90 = por %p88, %p89
      %s91 = ssub.s32 %s15, %s22
      %p92 = scmp.eq.s32.totalorder %s91, 0
      %s94 = sadd.s32 %s93, 1
      %s95 = scalar_select %p92, %s93, %s94
      %p98 = pneg %p92
      %p99 = scmp.eq.s32.totalorder %s15, 1
      %p100 = por %p98, %p99
      %p101 = scmp.ne.s32.totalorder %s93, %s96
      %p102 = scmp.eq.s32.totalorder %s15, 0
      %p103 = por %p101, %p102
      %p104 = scmp.ne.s32.totalorder %s93, %s96
      %p105 = scmp.eq.s32.totalorder %s20, 1
      %p106 = por %p104, %p105
      %p107 = scmp.ne.s32.totalorder %s96, %s97
      %p108 = scmp.eq.s32.totalorder %s20, 0
      %p109 = por %p107, %p108
      %p110 = scmp.ne.s32.totalorder %s96, %s97
      %p111 = scmp.eq.s32.totalorder %s21, 1
      %p112 = por %p110, %p111
      %p114 = scmp.ne.s32.totalorder %s97, %s113
      %p115 = scmp.eq.s32.totalorder %s21, 0
      %p116 = por %p114, %p115
      %p117 = scmp.le.s32.totalorder 1, %s15
      %p118 = scmp.lt.s32.totalorder %s15, 3
      %p119 = pnand %p117, %p118
      %p120 = pneg %p119
      // Predicated region
      $region9: #{tpu_custom_call.1} parent=5 // pred_check
        _
      $region10: #{tpu_custom_call.1} parent=5 // pred_check_branch
        %122 = sbr.rel (%p119) target = $region12
      $region11: #{tpu_custom_call.1} parent=5 // pred_region
        %s123 = ssub.s32 %s15, 1
        // Predicated region
        $region13: #{tpu_custom_call.1} parent=11 // pred_check
          %p124 = pneg %p62
        $region14: #{tpu_custom_call.1} parent=11 // pred_check_branch
          %126 = sbr.rel (%p124) target = $region16
        $region15: #{tpu_custom_call.1} parent=11 // pred_region
          _
        $region16: #{tpu_custom_call.1} parent=11 // pred_fallthru
          _
        // Predicated region
        $region17: #{tpu_custom_call.1} parent=11 // pred_check
          %p127 = pneg %p83
        $region18: #{tpu_custom_call.1} parent=11 // pred_check_branch
          %129 = sbr.rel (%p127) target = $region20
        $region19: #{tpu_custom_call.1} parent=11 // pred_region
          _
        $region20: #{tpu_custom_call.1} parent=11 // pred_fallthru
          _
      $region12: #{tpu_custom_call.1} parent=5 // pred_fallthru
        _
      %p130 = scmp.lt.s32.totalorder %s15, 2
      // Predicated region
      $region21: #{tpu_custom_call.1} parent=5 // pred_check
        %p131 = pneg %p130
      $region22: #{tpu_custom_call.1} parent=5 // pred_check_branch
        %133 = sbr.rel (%p131) target = $region24
      $region23: #{tpu_custom_call.1} parent=5 // pred_region
        // Predicated region
        $region25: #{tpu_custom_call.1} parent=23 // pred_check
          %p134 = pneg %p35
        $region26: #{tpu_custom_call.1} parent=23 // pred_check_branch
          %136 = sbr.rel (%p134) target = $region28
        $region27: #{tpu_custom_call.1} parent=23 // pred_region
          %s137 = sand.u32 %s25, 1
          %s138 = scalar_lea.sflag [#allocation3], %s137
          %s139 = sand.u32 %s25, 1
          %s140 = smul.addr %s139, 32
          %s141 = scalar_lea.vmem [#allocation2], %s140
          %s143 = ssub.s32 512, 512
          %144 = vsyncadd %s138, %s143
          %s145 = smul.addr %s15, 4
          %s146 = smul.addr %s145, 128
          %s147 = scalar_lea.hbm %s0, %s146
          %s148 = sshll.u32 %s141, 4
          %s149 = int_to_ptr.vmem [resolvable:$true] %s148
          %154 = dma.hbm_to_vmem [thread:$0]  %s147, 512, %s149, %s138, 256, 256, 16
        $region28: #{tpu_custom_call.1} parent=23 // pred_fallthru
          _
      $region24: #{tpu_custom_call.1} parent=5 // pred_fallthru
        _
      %p155 = scmp.le.s32.totalorder 1, %s15
      %p156 = scmp.lt.s32.totalorder %s15, 3
      %p157 = pnand %p155, %p156
      %p158 = pneg %p157
      // Predicated region
      $region29: #{tpu_custom_call.1} parent=5 // pred_check
        _
      $region30: #{tpu_custom_call.1} parent=5 // pred_check_branch
        %160 = sbr.rel (%p157) target = $region32
      $region31: #{tpu_custom_call.1} parent=5 // pred_region
        %s161 = ssub.s32 %s15, 1
        %s162 = sand.u32 %s28, 1
        %s163 = scalar_lea.sflag [#allocation3], %s162
        %s164 = sand.u32 %s28, 1
        %s165 = smul.addr %s164, 32
        %s166 = scalar_lea.vmem [#allocation2], %s165
        // Predicated region
        $region33: #{tpu_custom_call.1} parent=31 // pred_check
          %p167 = pneg %p41
        $region34: #{tpu_custom_call.1} parent=31 // pred_check_branch
          %169 = sbr.rel (%p167) target = $region36
        $region35: #{tpu_custom_call.1} parent=31 // pred_region
          %170 = dma.done %s163, 512
        $region36: #{tpu_custom_call.1} parent=31 // pred_fallthru
          _
        %s171 = sand.u32 %s28, 1
        %s172 = scalar_lea.sflag [#allocation3], %s171
        %s173 = sand.u32 %s28, 1
        %s174 = smul.addr %s173, 32
        %s175 = scalar_lea.vmem [#allocation2], %s174
        %p176 = pneg %p41
        %p177 = pneg %p38
        %p178 = pneg %p62
        %p179 = pneg %p59
        %p180 = pneg %p83
        %p181 = pneg %p80
        %p182 = pneg %p109
        %p183 = pneg %p106
        %s184 = sand.u32 %s96, 1
        %s185 = scalar_lea.sflag [#allocation4], %s184
        %s186 = sand.u32 %s96, 1
        %s187 = smul.addr %s186, 16
        %s188 = scalar_lea.vmem [#allocation5], %s187
        %v189 = vld [vmem:[%s1] sm:$0xff]
        %v190 = vld [vmem:[%s166] sm:$0xff]
        %v191 = vld [vmem:[%s166 + $0x8] sm:$0xff]
        %v192 = vld [vmem:[%s166 + $0x10] sm:$0xff]
        %v193 = vld [vmem:[%s166 + $0x18] sm:$0xff]
        %v194 = vld [vmem:[%s2] sm:$0xff]
        %196 = vset.pattern.permute.xlu0 0
        %197 = vperm.xlu0 %196, %v194
        %v198 = vpop.permute.xlu0 %197
        %vm200 = vcmask 130048
        %v202 = vsel %vm200, %v189, 0
        %204 = vmatprep.subr.mxu0 0.0
        %205 = vmatpush1.msra.mxu0 0.0
        %206 = vmatprep.subr.mxu0 0.0
        %207 = vmatpush1.msra.mxu0 0.0
        %208 = vmatprep.subr.mxu0 0.0
        %209 = vmatpush1.msra.mxu0 0.0
        %210 = vmatprep.subr.mxu0 0.0
        %211 = vmatpush1.msra.mxu0 0.0
        %212 = vmatprep.subr.mxu0 0.0
        %213 = vmatpush1.msra.mxu0 0.0
        %214 = vmatprep.subr.mxu0 0.0
        %215 = vmatpush1.msra.mxu0 0.0
        %216 = vmatprep.subr.mxu0 0.0
        %217 = vmatpush1.msra.mxu0 0.0
        %218 = vmatprep.subr.mxu0 0.0
        %219 = vmatpush1.msra.mxu0 0.0
        %220 = vmatprep.subr.mxu0 0.0
        %221 = vmatpush1.msra.mxu0 0.0
        %222 = vmatprep.subr.mxu0 0.0
        %223 = vmatpush1.msra.mxu0 0.0
        %224 = vmatprep.subr.mxu0 0.0
        %225 = vmatpush1.msra.mxu0 0.0
        %226 = vmatprep.subr.mxu0 0.0
        %227 = vmatpush1.msra.mxu0 0.0
        %228 = vmatprep.subr.mxu0 0.0
        %229 = vmatpush1.msra.mxu0 0.0
        %230 = vmatprep.subr.mxu0 0.0
        %231 = vmatpush1.msra.mxu0 0.0
        %232 = vmatprep.subr.mxu0 %v193
        %233 = vmatpush1.msra.mxu0 %v192
        %234 = vmatprep.subr.mxu0 %v191
        %235 = vmatpush1.msra.mxu0 %v190
        %236 = vmatprep.subr.mxu0 0.0
        %237 = vmatpush2.msra.mxu0 0.0
        %238 = vmatprep.subr.mxu0 0.0
        %239 = vmatpush2.msra.mxu0 0.0
        %240 = vmatprep.subr.mxu0 0.0
        %241 = vmatpush2.msra.mxu0 0.0
        %242 = vmatprep.subr.mxu0 0.0
        %243 = vmatpush2.msra.mxu0 0.0
        %244 = vmatprep.subr.mxu0 0.0
        %245 = vmatpush2.msra.mxu0 0.0
        %246 = vmatprep.subr.mxu0 0.0
        %247 = vmatpush2.msra.mxu0 0.0
        %248 = vmatprep.subr.mxu0 0.0
        %249 = vmatpush2.msra.mxu0 0.0
        %250 = vmatprep.subr.mxu0 0.0
        %251 = vmatpush2.msra.mxu0 0.0
        %252 = vmatprep.subr.mxu0 0.0
        %253 = vmatpush2.msra.mxu0 0.0
        %254 = vmatprep.subr.mxu0 0.0
        %255 = vmatpush2.msra.mxu0 0.0
        %256 = vmatprep.subr.mxu0 0.0
        %257 = vmatpush2.msra.mxu0 0.0
        %258 = vmatprep.subr.mxu0 0.0
        %259 = vmatpush2.msra.mxu0 0.0
        %260 = vmatprep.subr.mxu0 0.0
        %261 = vmatpush2.msra.mxu0 0.0
        %262 = vmatprep.subr.mxu0 0.0
        %263 = vmatpush2.msra.mxu0 0.0
        %264 = vmatprep.subr.mxu0 0.0
        %265 = vmatpush2.msra.mxu0 0.0
        %266 = vmatprep.subr.mxu0 0.0
        %267 = vmatpush2.msra.mxu0 0.0
        %268 = vmatprep.mubr.f32.mxu0 0.0
        %269 = vmatmul.mubr.f32.gmra.mxu0 %v202
        %v270 = vpop.f32.mrf.mxu0
        %v271 = vadd.f32 %v198, %v270
        %v272 = vpop.f32.mrf.mxu0
        %v273 = vadd.f32 %v198, %v272
        %274 = vdwg.mxu0
        %v275 = vmul.f32 %v271, 0.5
        %v276 = vmul.f32 %v273, 0.5
        %v277 = vmul.f32 %v271, 0.70710677
        %v278 = vmul.f32 %v273, 0.70710677
        %v279 = verf.f32.pop %v277
        %v280 = verf.f32.pop %v278
        %v281 = vadd.f32 %v279, 1.0
        %v282 = vadd.f32 %v280, 1.0
        %v283 = vmul.f32 %v275, %v281
        %v284 = vmul.f32 %v276, %v282
        %285 = vst [vmem:[%s188] sm:$0xff] %v283
        %286 = vst [vmem:[%s188 + $0x8] sm:$0xff] %v284
        %s287 = sand.u32 %s96, 1
        %s288 = scalar_lea.sflag [#allocation4], %s287
        %s289 = sand.u32 %s96, 1
        %s290 = smul.addr %s289, 16
        %s291 = scalar_lea.vmem [#allocation5], %s290
        // Predicated region
        $region37: #{tpu_custom_call.1} parent=31 // pred_check
          %p292 = pneg %p106
        $region38: #{tpu_custom_call.1} parent=31 // pred_check_branch
          %294 = sbr.rel (%p292) target = $region40
        $region39: #{tpu_custom_call.1} parent=31 // pred_region
          %s296 = ssub.s32 256, 256
          %297 = vsyncadd %s288, %s296
          %s298 = smul.addr %s20, 2
          %s299 = smul.addr %s298, 128
          %s300 = scalar_lea.hbm %s3, %s299
          %s302 = sshll.u32 %s291, 4
          %s303 = int_to_ptr.vmem [resolvable:$true] %s302
          %305 = dma.vmem_to_hbm [thread:$0]  %s303, 256, %s300, %s288
        $region40: #{tpu_custom_call.1} parent=31 // pred_fallthru
          _
      $region32: #{tpu_custom_call.1} parent=5 // pred_fallthru
        _
      %p306 = scmp.le.s32.totalorder 2, %s15
      // Predicated region
      $region41: #{tpu_custom_call.1} parent=5 // pred_check
        %p307 = pneg %p306
      $region42: #{tpu_custom_call.1} parent=5 // pred_check_branch
        %309 = sbr.rel (%p307) target = $region44
      $region43: #{tpu_custom_call.1} parent=5 // pred_region
        %s310 = ssub.s32 %s15, 2
        // Predicated region
        $region45: #{tpu_custom_call.1} parent=43 // pred_check
          %p311 = pneg %p112
        $region46: #{tpu_custom_call.1} parent=43 // pred_check_branch
          %313 = sbr.rel (%p311) target = $region48
        $region47: #{tpu_custom_call.1} parent=43 // pred_region
          %s314 = sand.u32 %s97, 1
          %s315 = scalar_lea.sflag [#allocation4], %s314
          %s316 = sand.u32 %s97, 1
          %s317 = smul.addr %s316, 16
          %s318 = scalar_lea.vmem [#allocation5], %s317
          %319 = dma.done %s315, 256
        $region48: #{tpu_custom_call.1} parent=43 // pred_fallthru
          _
      $region44: #{tpu_custom_call.1} parent=5 // pred_fallthru
        _
    $region6: #{tpu_custom_call.1} parent=1 // loop_footer
      %s19 = sadd.s32 1, %s15
    $region7: #{tpu_custom_call.1} parent=1 // loop_footer_branch
      %14 = sbr.rel target = $region3
    $region8: #{tpu_custom_call.1} parent=1 // loop_exit
      _
    %320 = vsyncpa [#allocation3], 1
    %s321 = scalar_lea.sflag [#allocation3], 1
    %322 = vsyncpa %s321, 1
    %323 = vsyncpa [#allocation4], 1
    %s324 = scalar_lea.sflag [#allocation4], 1
    %325 = vsyncpa %s324, 1

</llo_original>
